<compile_context>
chip_gen: v7x
topology: tpu7x:2x2x1
jax: 0.10.0
libtpu: 0.0.40
codegen_flags: <defaults>
</compile_context>

<pallas_src>
import functools

import jax
import jax.numpy as jnp
from jax.experimental import pallas as pl
from jax.experimental.pallas import tpu as pltpu


D_IN, D_H1, D_H2, D_OUT = 196, 128, 64, 10


def _cdiv(a, b):
    return -(-a // b)


def _round_up(n, m):
    return ((n + m - 1) // m) * m


def mlp_kernel(x_ref, w1_ref, b1_ref, w2_ref, b2_ref, w3_ref, b3_ref, o_ref):
    # Cast x to bf16 in VMEM (no wrapper-side pre-pass over HBM).
    x = x_ref[...].astype(jnp.bfloat16)

    # fc1 + ReLU  (bf16 MXU inputs, f32 accumulate / elementwise)
    h1 = jnp.dot(x, w1_ref[...], preferred_element_type=jnp.float32)
    h1 = jnp.maximum(h1 + b1_ref[...], 0.0)
    # dropout(0.2) is identity at inference time
    # TODO(synk): training-mode dropout (pltpu.prng_random_bits mask) not implemented

    # fc2 + ReLU
    h2 = jnp.dot(h1.astype(jnp.bfloat16), w2_ref[...],
                 preferred_element_type=jnp.float32)
    h2 = jnp.maximum(h2 + b2_ref[...], 0.0)

    # fc3 (logits, no activation)
    o_ref[...] = (jnp.dot(h2.astype(jnp.bfloat16), w3_ref[...],
                          preferred_element_type=jnp.float32)
                  + b3_ref[...])


def _choose_tile(B, block_b):
    # At most half the batch (so >= 2 grid steps for megacore on v7x when B is
    # big enough), MXU/sublane aligned, capped by block_b and by the batch.
    tb = _round_up(_cdiv(B, 2), 256)
    tb = min(tb, block_b)
    tb = min(tb, _round_up(B, 8))   # don't allocate tiles far beyond B
    return max(tb, 8)


@functools.partial(jax.jit, static_argnames=("block_b",))
def claude_net_forward(x, params, *, block_b=4096):
    """x: (B, 1, 14, 14) or (B, 196) float32.  Returns (B, 10) f32 logits."""
    if x.ndim > 2:
        x = x.reshape(x.shape[0], -1)          # FLATTENING (matches torch .view)
    x = x.astype(jnp.float32)
    w1, b1, w2, b2, w3, b3 = params
    B = x.shape[0]

    # --- tiling: no padding; Pallas masks the partial last block -------------
    TB = _choose_tile(B, block_b)
    grid = (_cdiv(B, TB),)

    # --- dtype prep: bf16 weight operands (tiny, one-time), f32 biases -------
    w1b, w2b, w3b = (w.astype(jnp.bfloat16) for w in (w1, w2, w3))
    b1f, b2f, b3f = (b.astype(jnp.float32).reshape(1, -1) for b in (b1, b2, b3))

    # --- specs: x/out tiled over the batch grid, params VMEM-resident --------
    x_spec = pl.BlockSpec((TB, D_IN), lambda i: (i, 0))
    o_spec = pl.BlockSpec((TB, D_OUT), lambda i: (i, 0))
    const = lambda arr: pl.BlockSpec(arr.shape, lambda i: (0, 0))

    # --- VMEM budget: ~2x real footprint, capped at 40 MiB (v7x-safe) --------
    tile_bytes = (2 * TB * D_IN * 4            # x tiles, f32, 2 buffers
                  + 2 * TB * D_OUT * 4         # out tiles, f32, 2 buffers
                  + TB * (D_IN * 2             # bf16 x copy
                          + (D_H1 + D_H2) * 4  # h1/h2 f32
                          + (D_H1 + D_H2) * 2))  # h1/h2 bf16 copies
    weight_bytes = (D_IN * D_H1 + D_H1 * D_H2 + D_H2 * D_OUT) * 2 \
                   + (D_H1 + D_H2 + D_OUT) * 4
    vmem_limit = min(max(2 * (tile_bytes + weight_bytes), 4 << 20) + (2 << 20),
                     40 << 20)

    flops = 2 * B * (D_IN * D_H1 + D_H1 * D_H2 + D_H2 * D_OUT)
    bytes_accessed = B * (D_IN * 4 + D_OUT * 4) + weight_bytes

    out = pl.pallas_call(
        mlp_kernel,
        out_shape=jax.ShapeDtypeStruct((B, D_OUT), jnp.float32),
        grid=grid,
        in_specs=[
            x_spec,
            const(w1b), const(b1f),
            const(w2b), const(b2f),
            const(w3b), const(b3f),
        ],
        out_specs=o_spec,
        compiler_params=pltpu.CompilerParams(
            dimension_semantics=("parallel",),   # megacore sharding on v7x
            vmem_limit_bytes=vmem_limit,
        ),
        cost_estimate=pl.CostEstimate(
            flops=flops, transcendentals=0, bytes_accessed=bytes_accessed),
    )(x, w1b, b1f, w2b, b2f, w3b, b3f)

    return out


def init_params(key):
    """Deterministic synthetic params with the shapes ClaudeNet.__init__ implies."""
    ks = jax.random.split(key, 6)

    def lin(kw, kb, fan_in, fan_out):
        bound = 1.0 / jnp.sqrt(fan_in)
        w = jax.random.uniform(kw, (fan_in, fan_out), jnp.float32, -bound, bound)
        b = jax.random.uniform(kb, (1, fan_out), jnp.float32, -bound, bound)
        return w, b

    w1, b1 = lin(ks[0], ks[1], D_IN, D_H1)
    w2, b2 = lin(ks[2], ks[3], D_H1, D_H2)
    w3, b3 = lin(ks[4], ks[5], D_H2, D_OUT)
    return (w1, b1, w2, b2, w3, b3)


def reference_forward(x, params):
    """Pure-JAX f32 reference (eval-mode dropout = identity)."""
    if x.ndim > 2:
        x = x.reshape(x.shape[0], -1)
    w1, b1, w2, b2, w3, b3 = params
    h = jnp.maximum(x @ w1 + b1, 0.0)
    h = jnp.maximum(h @ w2 + b2, 0.0)
    return h @ w3 + b3


if __name__ == "__main__":
    key = jax.random.PRNGKey(0)
    k_x, k_x2, k_p = jax.random.split(key, 3)
    params = init_params(k_p)

    # small MNIST-like input consistent with fc1 in_features=196 (= 14*14), NCHW
    x = jax.random.normal(k_x, (2, 1, 14, 14), jnp.float32)
    out = claude_net_forward(x, params)
    jax.block_until_ready(out)
    ref = reference_forward(x, params)
    assert out.shape == (2, 10)
    # bf16 MXU operands vs f32 reference -> loose-but-meaningful tolerance
    assert jnp.allclose(out, ref, atol=5e-2, rtol=5e-2), "mismatch vs JAX reference"

    # second case: multi-step grid with a partial (masked) last batch block
    x2 = jax.random.normal(k_x2, (600, 196), jnp.float32)
    out2 = claude_net_forward(x2, params)
    jax.block_until_ready(out2)
    ref2 = reference_forward(x2, params)
    assert out2.shape == (600, 10)
    assert jnp.allclose(out2, ref2, atol=5e-2, rtol=5e-2), "mismatch (partial block)"

    print("KERNEL_OK")
</pallas_src>

<mosaic_0001>
module attributes {stable_mosaic.version = 11 : i64} {
  func.func @mlp_kernel(%arg0: i32, %arg1: memref<8x196xf32, #tpu.memory_space<vmem>>, %arg2: memref<196x128xbf16, #tpu.memory_space<vmem>>, %arg3: memref<1x128xf32, #tpu.memory_space<vmem>>, %arg4: memref<128x64xbf16, #tpu.memory_space<vmem>>, %arg5: memref<1x64xf32, #tpu.memory_space<vmem>>, %arg6: memref<64x10xbf16, #tpu.memory_space<vmem>>, %arg7: memref<1x10xf32, #tpu.memory_space<vmem>>, %arg8: memref<8x10xf32, #tpu.memory_space<vmem>>) attributes {dimension_semantics = [#tpu.dimension_semantics<parallel>], iteration_bounds = array<i64: 1>, scalar_prefetch = 0 : i64, scratch_operands = 0 : i64, tpu.core_type = #tpu.core_type<tc>, window_params = [{transform_indices = @transform_0, window_bounds = array<i64: 8, 196>}, {pipeline_mode = #tpu.pipeline_mode<synchronous>, transform_indices = @transform_1, window_bounds = array<i64: 196, 128>}, {pipeline_mode = #tpu.pipeline_mode<synchronous>, transform_indices = @transform_2, window_bounds = array<i64: 1, 128>}, {pipeline_mode = #tpu.pipeline_mode<synchronous>, transform_indices = @transform_3, window_bounds = array<i64: 128, 64>}, {pipeline_mode = #tpu.pipeline_mode<synchronous>, transform_indices = @transform_4, window_bounds = array<i64: 1, 64>}, {pipeline_mode = #tpu.pipeline_mode<synchronous>, transform_indices = @transform_5, window_bounds = array<i64: 64, 10>}, {pipeline_mode = #tpu.pipeline_mode<synchronous>, transform_indices = @transform_6, window_bounds = array<i64: 1, 10>}, {transform_indices = @transform_7, window_bounds = array<i64: 8, 10>}]} {
    %c0 = arith.constant 0 : index
    %c0_0 = arith.constant 0 : index
    %0 = vector.load %arg1[%c0, %c0_0] : memref<8x196xf32, #tpu.memory_space<vmem>>, vector<8x196xf32>
    %1 = arith.truncf %0 : vector<8x196xf32> to vector<8x196xbf16>
    %c0_1 = arith.constant 0 : index
    %c0_2 = arith.constant 0 : index
    %2 = vector.load %arg2[%c0_1, %c0_2] : memref<196x128xbf16, #tpu.memory_space<vmem>>, vector<196x128xbf16>
    %cst = arith.constant dense<0.000000e+00> : vector<8x128xf32>
    %3 = tpu.matmul %1, %2, %cst {dimension_numbers = #tpu.dot_dimension_numbers<[1], [0], [0], [1], [0, 0, 1, 1], [], []>} : vector<8x196xbf16>, vector<196x128xbf16>, vector<8x128xf32> -> vector<8x128xf32>
    %c0_3 = arith.constant 0 : index
    %c0_4 = arith.constant 0 : index
    %4 = vector.load %arg3[%c0_3, %c0_4] : memref<1x128xf32, #tpu.memory_space<vmem>>, vector<1x128xf32>
    %5 = vector.broadcast %4 : vector<1x128xf32> to vector<8x128xf32>
    %6 = arith.addf %3, %5 : vector<8x128xf32>
    %cst_5 = arith.constant 0.000000e+00 : f32
    %7 = vector.broadcast %cst_5 : f32 to vector<8x128xf32>
    %8 = arith.maximumf %6, %7 : vector<8x128xf32>
    %9 = arith.truncf %8 : vector<8x128xf32> to vector<8x128xbf16>
    %c0_6 = arith.constant 0 : index
    %c0_7 = arith.constant 0 : index
    %10 = vector.load %arg4[%c0_6, %c0_7] : memref<128x64xbf16, #tpu.memory_space<vmem>>, vector<128x64xbf16>
    %cst_8 = arith.constant dense<0.000000e+00> : vector<8x64xf32>
    %11 = tpu.matmul %9, %10, %cst_8 {dimension_numbers = #tpu.dot_dimension_numbers<[1], [0], [0], [1], [0, 0, 1, 1], [], []>} : vector<8x128xbf16>, vector<128x64xbf16>, vector<8x64xf32> -> vector<8x64xf32>
    %c0_9 = arith.constant 0 : index
    %c0_10 = arith.constant 0 : index
    %12 = vector.load %arg5[%c0_9, %c0_10] : memref<1x64xf32, #tpu.memory_space<vmem>>, vector<1x64xf32>
    %13 = vector.broadcast %12 : vector<1x64xf32> to vector<8x64xf32>
    %14 = arith.addf %11, %13 : vector<8x64xf32>
    %cst_11 = arith.constant 0.000000e+00 : f32
    %15 = vector.broadcast %cst_11 : f32 to vector<8x64xf32>
    %16 = arith.maximumf %14, %15 : vector<8x64xf32>
    %17 = arith.truncf %16 : vector<8x64xf32> to vector<8x64xbf16>
    %c0_12 = arith.constant 0 : index
    %c0_13 = arith.constant 0 : index
    %18 = vector.load %arg6[%c0_12, %c0_13] : memref<64x10xbf16, #tpu.memory_space<vmem>>, vector<64x10xbf16>
    %cst_14 = arith.constant dense<0.000000e+00> : vector<8x10xf32>
    %19 = tpu.matmul %17, %18, %cst_14 {dimension_numbers = #tpu.dot_dimension_numbers<[1], [0], [0], [1], [0, 0, 1, 1], [], []>} : vector<8x64xbf16>, vector<64x10xbf16>, vector<8x10xf32> -> vector<8x10xf32>
    %c0_15 = arith.constant 0 : index
    %c0_16 = arith.constant 0 : index
    %20 = vector.load %arg7[%c0_15, %c0_16] : memref<1x10xf32, #tpu.memory_space<vmem>>, vector<1x10xf32>
    %21 = vector.broadcast %20 : vector<1x10xf32> to vector<8x10xf32>
    %22 = arith.addf %19, %21 : vector<8x10xf32>
    %c0_17 = arith.constant 0 : index
    %c0_18 = arith.constant 0 : index
    %23 = vector.load %arg8[%c0_17, %c0_18] : memref<8x10xf32, #tpu.memory_space<vmem>>, vector<8x10xf32>
    tpu.vector_store %arg8[%c0_17, %c0_18], %22 {strides = array<i32>} : memref<8x10xf32, #tpu.memory_space<vmem>>, vector<8x10xf32>,
    return
  }
  func.func @transform_0(%arg0: i32) -> (i32, i32) {
    %c0_i32 = arith.constant 0 : i32
    %c0_i32_0 = arith.constant 0 : i32
    return %arg0, %c0_i32 : i32, i32
  }
  func.func @transform_1(%arg0: i32) -> (i32, i32) {
    %c0_i32 = arith.constant 0 : i32
    %c0_i32_0 = arith.constant 0 : i32
    %c0_i32_1 = arith.constant 0 : i32
    return %c0_i32, %c0_i32_0 : i32, i32
  }
  func.func @transform_2(%arg0: i32) -> (i32, i32) {
    %c0_i32 = arith.constant 0 : i32
    %c0_i32_0 = arith.constant 0 : i32
    %c0_i32_1 = arith.constant 0 : i32
    return %c0_i32, %c0_i32_0 : i32, i32
  }
  func.func @transform_3(%arg0: i32) -> (i32, i32) {
    %c0_i32 = arith.constant 0 : i32
    %c0_i32_0 = arith.constant 0 : i32
    %c0_i32_1 = arith.constant 0 : i32
    return %c0_i32, %c0_i32_0 : i32, i32
  }
  func.func @transform_4(%arg0: i32) -> (i32, i32) {
    %c0_i32 = arith.constant 0 : i32
    %c0_i32_0 = arith.constant 0 : i32
    %c0_i32_1 = arith.constant 0 : i32
    return %c0_i32, %c0_i32_0 : i32, i32
  }
  func.func @transform_5(%arg0: i32) -> (i32, i32) {
    %c0_i32 = arith.constant 0 : i32
    %c0_i32_0 = arith.constant 0 : i32
    %c0_i32_1 = arith.constant 0 : i32
    return %c0_i32, %c0_i32_0 : i32, i32
  }
  func.func @transform_6(%arg0: i32) -> (i32, i32) {
    %c0_i32 = arith.constant 0 : i32
    %c0_i32_0 = arith.constant 0 : i32
    %c0_i32_1 = arith.constant 0 : i32
    return %c0_i32, %c0_i32_0 : i32, i32
  }
  func.func @transform_7(%arg0: i32) -> (i32, i32) {
    %c0_i32 = arith.constant 0 : i32
    %c0_i32_0 = arith.constant 0 : i32
    return %arg0, %c0_i32 : i32, i32
  }
}

</mosaic_0001>

<llo_original>
// kernel: claude_net_forward.1
$region0: #{claude_net_forward.1}
  #allocation0 [shape = 'u32[]', space=smem, size = 0x4, offset = 0x4, fixed_abs, tag = 'smem constant byte address 0x4 - core index']
  #allocation1 [shape = 'u32[144,128]{1,0:T(1,128)}', space=vmem, size = 0x12000, scoped, tag = 'internal scratch']
  %s0 = inlined_call_operand.vmem [shape: f32[2,196], index: 0, kind: input, shape index: {}]
  %s1 = inlined_call_operand.vmem [shape: bf16[196,128], index: 1, kind: input, shape index: {}]
  %s2 = inlined_call_operand.vmem [shape: f32[1,128], index: 2, kind: input, shape index: {}]
  %s3 = inlined_call_operand.vmem [shape: bf16[128,64], index: 3, kind: input, shape index: {}]
  %s4 = inlined_call_operand.vmem [shape: f32[1,64], index: 4, kind: input, shape index: {}]
  %s5 = inlined_call_operand.vmem [shape: bf16[64,10], index: 5, kind: input, shape index: {}]
  %s6 = inlined_call_operand.vmem [shape: f32[1,10], index: 6, kind: input, shape index: {}]
  %s7 = inlined_call_operand.hbm [shape: f32[2,10], index: 7, kind: output, shape index: {}]
  %s8 = sld [smem:[#allocation0]]
  $region38: #{claude_net_forward.1} parent=0
    _
  %s10 = ssub.s32 1, %s8
  %s11 = scalar_select 0, %s10, %s8
  $region1: #{claude_net_forward.1} parent=0
    #allocation2 [shape = 'u8[4096]{0}', space=vmem, size = 0x1000, scoped, tag = 'output window, operand 0, single buffered']
    #allocation3 [shape = 's32[1]{0}', space=sflag, size = 0x4, scoped, tag = 'scoped memory for claude_net_forward.1']
    %12 = vsyncpa [#allocation3], 0
    // Predicated region
    $region2: #{claude_net_forward.1} parent=1 // pred_check
      _
    $region3: #{claude_net_forward.1} parent=1 // pred_check_branch
      %14 = sbr.rel (0) target = $region5
    $region4: #{claude_net_forward.1} parent=1 // pred_region
      _
    $region5: #{claude_net_forward.1} parent=1 // pred_fallthru
      _
    // Predicated region
    $region6: #{claude_net_forward.1} parent=1 // pred_check
      _
    $region7: #{claude_net_forward.1} parent=1 // pred_check_branch
      %16 = sbr.rel (0) target = $region9
    $region8: #{claude_net_forward.1} parent=1 // pred_region
      _
    $region9: #{claude_net_forward.1} parent=1 // pred_fallthru
      _
    // Predicated region
    $region10: #{claude_net_forward.1} parent=1 // pred_check
      _
    $region11: #{claude_net_forward.1} parent=1 // pred_check_branch
      %18 = sbr.rel (0) target = $region13
    $region12: #{claude_net_forward.1} parent=1 // pred_region
      _
    $region13: #{claude_net_forward.1} parent=1 // pred_fallthru
      _
    // Predicated region
    $region14: #{claude_net_forward.1} parent=1 // pred_check
      _
    $region15: #{claude_net_forward.1} parent=1 // pred_check_branch
      %20 = sbr.rel (0) target = $region17
    $region16: #{claude_net_forward.1} parent=1 // pred_region
      _
    $region17: #{claude_net_forward.1} parent=1 // pred_fallthru
      _
    // Predicated region
    $region18: #{claude_net_forward.1} parent=1 // pred_check
      _
    $region19: #{claude_net_forward.1} parent=1 // pred_check_branch
      %22 = sbr.rel (0) target = $region21
    $region20: #{claude_net_forward.1} parent=1 // pred_region
      _
    $region21: #{claude_net_forward.1} parent=1 // pred_fallthru
      _
    // Predicated region
    $region22: #{claude_net_forward.1} parent=1 // pred_check
      _
    $region23: #{claude_net_forward.1} parent=1 // pred_check_branch
      %24 = sbr.rel (0) target = $region25
    $region24: #{claude_net_forward.1} parent=1 // pred_region
      _
    $region25: #{claude_net_forward.1} parent=1 // pred_fallthru
      _
    // Predicated region
    $region26: #{claude_net_forward.1} parent=1 // pred_check
      _
    $region27: #{claude_net_forward.1} parent=1 // pred_check_branch
      %26 = sbr.rel (0) target = $region29
    $region28: #{claude_net_forward.1} parent=1 // pred_region
      _
    $region29: #{claude_net_forward.1} parent=1 // pred_fallthru
      _
    %v28 = vld [vmem:[%s0] sm:$0xf]
    %v29 = vld [vmem:[%s0 + $0x4] sm:$0xf]
    %v30 = vld [vmem:[%s0 + $0x8] sm:$0xf]
    %v31 = vld [vmem:[%s0 + $0xc] sm:$0xf]
    %v36 = vcombine.low %v28, %v29
    %v37 = vcombine.low %v30, %v31
    %v39 = vunpack.c.l.s4 1983009808
    %v40 = vunpack.c.0.s8 %v39
    %v41 = vlaneseq
    %v42 = vshrl.u32 %v41, 7
    %v43 = vsub.s32 %v40, %v42
    %v44 = vrot.slane %v36, %v43
    %v46 = vunpack.c.l.s4 1983009808
    %v47 = vunpack.c.0.s8 %v46
    %v48 = vlaneseq
    %v49 = vshrl.u32 %v48, 7
    %v50 = vsub.s32 %v47, %v49
    %v51 = vrot.slane %v37, %v50
    %v52 = vcombine.low %v44, %v51
    %v53 = vcombine.high %v44, %v51
    %v56 = vpack.c.bf16 %v52, %v52
    %v57 = vpack.c.bf16 %v53, %v53
    %v58 = vld [vmem:[%s1] sm:$0xf]
    %v59 = vld [vmem:[%s1 + $0x4] sm:$0xf]
    %v60 = vld [vmem:[%s1 + $0x8] sm:$0xf]
    %v61 = vld [vmem:[%s1 + $0xc] sm:$0xf]
    %v62 = vld [vmem:[%s1 + $0x10] sm:$0xf]
    %v63 = vld [vmem:[%s1 + $0x14] sm:$0xf]
    %v64 = vld [vmem:[%s1 + $0x18] sm:$0xf]
    %v65 = vld [vmem:[%s1 + $0x1c] sm:$0xf]
    %v66 = vld [vmem:[%s1 + $0x20] sm:$0xf]
    %v67 = vld [vmem:[%s1 + $0x24] sm:$0xf]
    %v68 = vld [vmem:[%s1 + $0x28] sm:$0xf]
    %v69 = vld [vmem:[%s1 + $0x2c] sm:$0xf]
    %v70 = vld [vmem:[%s1 + $0x30] sm:$0xf]
    %v71 = vld [vmem:[%s1 + $0x34] sm:$0xf]
    %v72 = vld [vmem:[%s1 + $0x38] sm:$0xf]
    %v73 = vld [vmem:[%s1 + $0x3c] sm:$0xf]
    %v74 = vld [vmem:[%s1 + $0x40] sm:$0xf]
    %v75 = vld [vmem:[%s1 + $0x44] sm:$0xf]
    %v76 = vld [vmem:[%s1 + $0x48] sm:$0xf]
    %v77 = vld [vmem:[%s1 + $0x4c] sm:$0xf]
    %v78 = vld [vmem:[%s1 + $0x50] sm:$0xf]
    %v79 = vld [vmem:[%s1 + $0x54] sm:$0xf]
    %v80 = vld [vmem:[%s1 + $0x58] sm:$0xf]
    %v81 = vld [vmem:[%s1 + $0x5c] sm:$0xf]
    %v82 = vld [vmem:[%s1 + $0x60] sm:$0x3]
    %v83 = vld [vmem:[%s2] sm:$0x1]
    %v85 = vlaneseq
    %v86 = vshrl.u32 %v85, 7
    %v87 = vsub.s32 0, %v86
    %v88 = vrot.slane %v83, %v87
    %v115 = vunpack.c.l.b16 %v58
    %v116 = vunpack.c.l.b16 %v59
    %v117 = vunpack.c.l.b16 %v60
    %v118 = vunpack.c.l.b16 %v61
    %v119 = vunpack.c.l.b16 %v62
    %v120 = vunpack.c.l.b16 %v63
    %v121 = vunpack.c.l.b16 %v64
    %v122 = vunpack.c.l.b16 %v65
    %v123 = vunpack.c.l.b16 %v66
    %v124 = vunpack.c.l.b16 %v67
    %v125 = vunpack.c.l.b16 %v68
    %v126 = vunpack.c.l.b16 %v69
    %v127 = vunpack.c.l.b16 %v70
    %v128 = vunpack.c.l.b16 %v71
    %v129 = vunpack.c.l.b16 %v72
    %v130 = vunpack.c.l.b16 %v73
    %v131 = vunpack.c.l.b16 %v74
    %v132 = vunpack.c.l.b16 %v75
    %v133 = vunpack.c.l.b16 %v76
    %v134 = vunpack.c.l.b16 %v77
    %v135 = vunpack.c.l.b16 %v78
    %v136 = vunpack.c.l.b16 %v79
    %v137 = vunpack.c.l.b16 %v80
    %v138 = vunpack.c.l.b16 %v81
    %v139 = vunpack.c.l.b16 %v82
    %v140 = vpack.c.b16 %v116, %v115
    %v141 = vpack.c.b16 %v118, %v117
    %v142 = vpack.c.b16 %v120, %v119
    %v143 = vpack.c.b16 %v122, %v121
    %v144 = vpack.c.b16 %v124, %v123
    %v145 = vpack.c.b16 %v126, %v125
    %v146 = vpack.c.b16 %v128, %v127
    %v147 = vpack.c.b16 %v130, %v129
    %v148 = vpack.c.b16 %v132, %v131
    %v149 = vpack.c.b16 %v134, %v133
    %v150 = vpack.c.b16 %v136, %v135
    %v151 = vpack.c.b16 %v138, %v137
    %v152 = vpack.c.b16 %v139, %v139
    %vm165 = vcmask 556032
    %v167 = vsel %vm165, %v57, 0
    %vm169 = vcmask 1041408
    %v171 = vsel %vm169, %v152, 0
    %173 = vmatprep.subr.bf16.mxu0 0
    %174 = vmatpush1.bf16.msra.mxu0 %v140
    %175 = vmatprep.subr.bf16.mxu0 0
    %176 = vmatpush1.bf16.msra.mxu0 %v141
    %177 = vmatprep.subr.bf16.mxu0 0
    %178 = vmatpush1.bf16.msra.mxu0 %v142
    %179 = vmatprep.subr.bf16.mxu0 0
    %180 = vmatpush1.bf16.msra.mxu0 %v143
    %181 = vmatprep.subr.bf16.mxu0 0
    %182 = vmatpush1.bf16.msra.mxu0 %v144
    %183 = vmatprep.subr.bf16.mxu0 0
    %184 = vmatpush1.bf16.msra.mxu0 %v145
    %185 = vmatprep.subr.bf16.mxu0 0
    %186 = vmatpush1.bf16.msra.mxu0 %v146
    %187 = vmatprep.subr.bf16.mxu0 0
    %188 = vmatpush1.bf16.msra.mxu0 %v147
    %189 = vmatprep.subr.bf16.mxu0 0
    %190 = vmatpush1.bf16.msra.mxu0 %v148
    %191 = vmatprep.subr.bf16.mxu0 0
    %192 = vmatpush1.bf16.msra.mxu0 %v149
    %193 = vmatprep.subr.bf16.mxu0 0
    %194 = vmatpush1.bf16.msra.mxu0 %v150
    %195 = vmatprep.subr.bf16.mxu0 0
    %196 = vmatpush1.bf16.msra.mxu0 %v151
    %197 = vmatprep.subr.bf16.mxu0 0
    %198 = vmatpush1.bf16.msra.mxu0 %v171
    %199 = vmatprep.subr.bf16.mxu0 0
    %200 = vmatpush1.bf16.msra.mxu0 0
    %201 = vmatprep.subr.bf16.mxu0 0
    %202 = vmatpush1.bf16.msra.mxu0 0
    %203 = vmatprep.subr.bf16.mxu0 0
    %204 = vmatpush1.bf16.msra.mxu0 0
    %205 = vmatprep.mubr.bf16.mxu0 %v167
    %206 = vmatmul.mubr.bf16.gmra.mrb[0].mxu0 %v56
    %v207 = vpop.f32.mrb[0].mxu0
    %v208 = vadd.f32 %v88, %v207
    %v209 = vpop.f32.mrb[0].mxu0
    %v210 = vpop.f32.mrb[0].mxu0
    %v211 = vpop.f32.mrb[0].mxu0
    %212 = vdwg.mxu0
    %v213 = vmax.f32 %v208, 0.0
    %v214 = vpack.c.bf16 %v213, %v213
    %v215 = vld [vmem:[%s3] sm:$0xf]
    %v216 = vld [vmem:[%s3 + $0x4] sm:$0xf]
    %v217 = vld [vmem:[%s3 + $0x8] sm:$0xf]
    %v218 = vld [vmem:[%s3 + $0xc] sm:$0xf]
    %v219 = vld [vmem:[%s3 + $0x10] sm:$0xf]
    %v220 = vld [vmem:[%s3 + $0x14] sm:$0xf]
    %v221 = vld [vmem:[%s3 + $0x18] sm:$0xf]
    %v222 = vld [vmem:[%s3 + $0x1c] sm:$0xf]
    %v223 = vld [vmem:[%s3 + $0x20] sm:$0xf]
    %v224 = vld [vmem:[%s3 + $0x24] sm:$0xf]
    %v225 = vld [vmem:[%s3 + $0x28] sm:$0xf]
    %v226 = vld [vmem:[%s3 + $0x2c] sm:$0xf]
    %v227 = vld [vmem:[%s3 + $0x30] sm:$0xf]
    %v228 = vld [vmem:[%s3 + $0x34] sm:$0xf]
    %v229 = vld [vmem:[%s3 + $0x38] sm:$0xf]
    %v230 = vld [vmem:[%s3 + $0x3c] sm:$0xf]
    %v231 = vld [vmem:[%s4] sm:$0x1]
    %v233 = vlaneseq
    %v234 = vshrl.u32 %v233, 7
    %v235 = vsub.s32 0, %v234
    %v236 = vrot.slane %v231, %v235
    %v254 = vunpack.c.l.b16 %v215
    %v255 = vunpack.c.l.b16 %v216
    %v256 = vunpack.c.l.b16 %v217
    %v257 = vunpack.c.l.b16 %v218
    %v258 = vunpack.c.l.b16 %v219
    %v259 = vunpack.c.l.b16 %v220
    %v260 = vunpack.c.l.b16 %v221
    %v261 = vunpack.c.l.b16 %v222
    %v262 = vunpack.c.l.b16 %v223
    %v263 = vunpack.c.l.b16 %v224
    %v264 = vunpack.c.l.b16 %v225
    %v265 = vunpack.c.l.b16 %v226
    %v266 = vunpack.c.l.b16 %v227
    %v267 = vunpack.c.l.b16 %v228
    %v268 = vunpack.c.l.b16 %v229
    %v269 = vunpack.c.l.b16 %v230
    %v270 = vpack.c.b16 %v255, %v254
    %v271 = vpack.c.b16 %v257, %v256
    %v272 = vpack.c.b16 %v259, %v258
    %v273 = vpack.c.b16 %v261, %v260
    %v274 = vpack.c.b16 %v263, %v262
    %v275 = vpack.c.b16 %v265, %v264
    %v276 = vpack.c.b16 %v267, %v266
    %v277 = vpack.c.b16 %v269, %v268
    %286 = vmatprep.subr.bf16.mxu0 0
    %287 = vmatpush1.bf16.msra.mxu0 %v270
    %288 = vmatprep.subr.bf16.mxu0 0
    %289 = vmatpush1.bf16.msra.mxu0 %v271
    %290 = vmatprep.subr.bf16.mxu0 0
    %291 = vmatpush1.bf16.msra.mxu0 %v272
    %292 = vmatprep.subr.bf16.mxu0 0
    %293 = vmatpush1.bf16.msra.mxu0 %v273
    %294 = vmatprep.subr.bf16.mxu0 0
    %295 = vmatpush1.bf16.msra.mxu0 %v274
    %296 = vmatprep.subr.bf16.mxu0 0
    %297 = vmatpush1.bf16.msra.mxu0 %v275
    %298 = vmatprep.subr.bf16.mxu0 0
    %299 = vmatpush1.bf16.msra.mxu0 %v276
    %300 = vmatprep.subr.bf16.mxu0 0
    %301 = vmatpush1.bf16.msra.mxu0 %v277
    %302 = vmatprep.subr.bf16.mxu0 0
    %303 = vmatpush1.bf16.msra.mxu0 0
    %304 = vmatprep.subr.bf16.mxu0 0
    %305 = vmatpush1.bf16.msra.mxu0 0
    %306 = vmatprep.subr.bf16.mxu0 0
    %307 = vmatpush1.bf16.msra.mxu0 0
    %308 = vmatprep.subr.bf16.mxu0 0
    %309 = vmatpush1.bf16.msra.mxu0 0
    %310 = vmatprep.subr.bf16.mxu0 0
    %311 = vmatpush1.bf16.msra.mxu0 0
    %312 = vmatprep.subr.bf16.mxu0 0
    %313 = vmatpush1.bf16.msra.mxu0 0
    %314 = vmatprep.subr.bf16.mxu0 0
    %315 = vmatpush1.bf16.msra.mxu0 0
    %316 = vmatprep.subr.bf16.mxu0 0
    %317 = vmatpush1.bf16.msra.mxu0 0
    %318 = vmatprep.mubr.bf16.mxu0 0
    %319 = vmatmul.mubr.bf16.gmra.mrb[0].mxu0 %v214
    %v320 = vpop.f32.mrb[0].mxu0
    %v321 = vadd.f32 %v236, %v320
    %v322 = vpop.f32.mrb[0].mxu0
    %v323 = vpop.f32.mrb[0].mxu0
    %v324 = vpop.f32.mrb[0].mxu0
    %325 = vdwg.mxu0
    %v326 = vmax.f32 %v321, 0.0
    %v327 = vpack.c.bf16 %v326, %v326
    %v328 = vld [vmem:[%s5] sm:$0xf]
    %v329 = vld [vmem:[%s5 + $0x4] sm:$0xf]
    %v330 = vld [vmem:[%s5 + $0x8] sm:$0xf]
    %v331 = vld [vmem:[%s5 + $0xc] sm:$0xf]
    %v332 = vld [vmem:[%s5 + $0x10] sm:$0xf]
    %v333 = vld [vmem:[%s5 + $0x14] sm:$0xf]
    %v334 = vld [vmem:[%s5 + $0x18] sm:$0xf]
    %v335 = vld [vmem:[%s5 + $0x1c] sm:$0xf]
    %v336 = vld [vmem:[%s6] sm:$0x1]
    %v338 = vlaneseq
    %v339 = vshrl.u32 %v338, 7
    %v340 = vsub.s32 0, %v339
    %v341 = vrot.slane %v336, %v340
    %v351 = vunpack.c.l.b16 %v328
    %v352 = vunpack.c.l.b16 %v329
    %v353 = vunpack.c.l.b16 %v330
    %v354 = vunpack.c.l.b16 %v331
    %v355 = vunpack.c.l.b16 %v332
    %v356 = vunpack.c.l.b16 %v333
    %v357 = vunpack.c.l.b16 %v334
    %v358 = vunpack.c.l.b16 %v335
    %v359 = vpack.c.b16 %v352, %v351
    %v360 = vpack.c.b16 %v354, %v353
    %v361 = vpack.c.b16 %v356, %v355
    %v362 = vpack.c.b16 %v358, %v357
    %vm367 = vcmask 523264
    %v369 = vsel %vm367, %v327, 0
    %371 = vmatprep.subr.bf16.mxu0 0
    %372 = vmatpush1.bf16.msra.mxu0 %v359
    %373 = vmatprep.subr.bf16.mxu0 0
    %374 = vmatpush1.bf16.msra.mxu0 %v360
    %375 = vmatprep.subr.bf16.mxu0 0
    %376 = vmatpush1.bf16.msra.mxu0 %v361
    %377 = vmatprep.subr.bf16.mxu0 0
    %378 = vmatpush1.bf16.msra.mxu0 %v362
    %379 = vmatprep.subr.bf16.mxu0 0
    %380 = vmatpush1.bf16.msra.mxu0 0
    %381 = vmatprep.subr.bf16.mxu0 0
    %382 = vmatpush1.bf16.msra.mxu0 0
    %383 = vmatprep.subr.bf16.mxu0 0
    %384 = vmatpush1.bf16.msra.mxu0 0
    %385 = vmatprep.subr.bf16.mxu0 0
    %386 = vmatpush1.bf16.msra.mxu0 0
    %387 = vmatprep.subr.bf16.mxu0 0
    %388 = vmatpush1.bf16.msra.mxu0 0
    %389 = vmatprep.subr.bf16.mxu0 0
    %390 = vmatpush1.bf16.msra.mxu0 0
    %391 = vmatprep.subr.bf16.mxu0 0
    %392 = vmatpush1.bf16.msra.mxu0 0
    %393 = vmatprep.subr.bf16.mxu0 0
    %394 = vmatpush1.bf16.msra.mxu0 0
    %395 = vmatprep.subr.bf16.mxu0 0
    %396 = vmatpush1.bf16.msra.mxu0 0
    %397 = vmatprep.subr.bf16.mxu0 0
    %398 = vmatpush1.bf16.msra.mxu0 0
    %399 = vmatprep.subr.bf16.mxu0 0
    %400 = vmatpush1.bf16.msra.mxu0 0
    %401 = vmatprep.subr.bf16.mxu0 0
    %402 = vmatpush1.bf16.msra.mxu0 0
    %403 = vmatprep.mubr.bf16.mxu0 0
    %404 = vmatmul.mubr.bf16.gmra.mrb[0].mxu0 %v369
    %v405 = vpop.f32.mrb[0].mxu0
    %v406 = vadd.f32 %v341, %v405
    %v407 = vpop.f32.mrb[0].mxu0
    %v408 = vpop.f32.mrb[0].mxu0
    %v409 = vpop.f32.mrb[0].mxu0
    %410 = vdwg.mxu0
    %vm411 = vcmask 80896
    %412 = vst.msk [vmem:[#allocation2] sm:$0xff] %vm411, %v406
    // Predicated region
    $region30: #{claude_net_forward.1} parent=1 // pred_check
      _
    $region31: #{claude_net_forward.1} parent=1 // pred_check_branch
      %414 = sbr.rel (0) target = $region33
    $region32: #{claude_net_forward.1} parent=1 // pred_region
      %s416 = ssub.s32 128, 32
      %417 = vsyncadd [#allocation3], %s416
      %s418 = sshll.u32 [#allocation2], 4
      %s419 = int_to_ptr.vmem [resolvable:$true] %s418
      %424 = dma.vmem_to_hbm [thread:$0]  %s419, 32, %s7, [#allocation3], 32, 32, 2
    $region33: #{claude_net_forward.1} parent=1 // pred_fallthru
      _
    // Predicated region
    $region34: #{claude_net_forward.1} parent=1 // pred_check
      _
    $region35: #{claude_net_forward.1} parent=1 // pred_check_branch
      %426 = sbr.rel (0) target = $region37
    $region36: #{claude_net_forward.1} parent=1 // pred_region
      %427 = dma.done [#allocation3], 128
    $region37: #{claude_net_forward.1} parent=1 // pred_fallthru
      _
    %428 = vsyncpa [#allocation3], 1

</llo_original>
